<compile_context>
chip_gen: v7x
topology: tpu7x:2x2x1
jax: 0.10.0
libtpu: 0.0.40
codegen_flags: <defaults>
</compile_context>

<pallas_src>
import functools

import jax
import jax.numpy as jnp
from jax.experimental import pallas as pl
from jax.experimental.pallas import tpu as pltpu


def _round_up(x, m):
    return ((x + m - 1) // m) * m


def _choose_tile(n, batch_tile):
    """Pick the batch tile (static, shapes are known at trace time)."""
    batch_tile = max(16, _round_up(batch_tile, 16))
    if n <= min(256, batch_tile):
        # Tiny batch: one block, 16-row aligned (bf16 packs 16 rows / vreg).
        return _round_up(n, 16)
    # Ensure >= 2 grid steps so v7x's two TensorCores both get work; keep the
    # tile a multiple of 256 to match the 256-wide MXU on v6e/v7x.
    two_step = _round_up(-(-n // 2), 256)
    return min(batch_tile, two_step)


def _mlp_kernel(x_ref, w1_ref, b1_ref, w2_ref, b2_ref, w3_ref, b3_ref, out_ref):
    # In-vreg cast of x to the weight compute dtype (bf16) -- rides an idle
    # VPU slot instead of a separate wrapper-side XLA cast pass through HBM.
    x = x_ref[...].astype(w1_ref.dtype)
    # Layer 1: Linear (bf16 MXU inputs, f32 accumulation) + bias + ReLU
    h = jnp.dot(x, w1_ref[...], preferred_element_type=jnp.float32)
    h = jnp.maximum(h + b1_ref[...], 0.0)            # b1 is (1, H1) -> row broadcast
    # Layer 2: Linear + ReLU
    h = jnp.dot(h.astype(w2_ref.dtype), w2_ref[...],
                preferred_element_type=jnp.float32)
    h = jnp.maximum(h + b2_ref[...], 0.0)
    # Output layer (output padded to 128 lanes -> lane-dense final matmul/store)
    logits = jnp.dot(h.astype(w3_ref.dtype), w3_ref[...],
                     preferred_element_type=jnp.float32)
    out_ref[...] = (logits + b3_ref[...]).astype(out_ref.dtype)


def prepare_mlp_params(params, n_out_pad=128):
    """One-time parameter prep (call ONCE, not per forward): cast weights to
    bf16, pad the 10-wide output layer up to 128 lanes, reshape biases to
    (1, F) f32 rows."""
    w1, b1, w2, b2, w3, b3 = params
    n_out = w3.shape[1]
    pad = n_out_pad - n_out
    return (
        w1.astype(jnp.bfloat16),
        b1.reshape(1, -1).astype(jnp.float32),
        w2.astype(jnp.bfloat16),
        b2.reshape(1, -1).astype(jnp.float32),
        jnp.pad(w3, ((0, 0), (0, pad))).astype(jnp.bfloat16),
        jnp.pad(b3, (0, pad)).reshape(1, -1).astype(jnp.float32),
    )


@functools.partial(jax.jit,
                   static_argnames=("input_size", "num_classes", "batch_tile"))
def mlp_forward(x, prepared_params, *, input_size, num_classes=10,
                batch_tile=1024):
    """Fused MLP forward. `x` may have any shape that flattens to
    (-1, input_size), matching `x.view(-1, input_size)` in the PyTorch code.
    `prepared_params` must come from `prepare_mlp_params`."""
    w1, b1, w2, b2, w3, b3 = prepared_params
    x2d = x.reshape(-1, input_size)                  # glue reshape in plain JAX
    n = x2d.shape[0]

    h1 = w1.shape[1]
    h2 = w2.shape[1]
    n_out_pad = w3.shape[1]                          # already padded to 128

    tile = _choose_tile(n, batch_tile)
    n_pad = _round_up(n, tile)

    x_p = x2d
    if n_pad != n:
        x_p = jnp.pad(x_p, ((0, n_pad - n), (0, 0)))
    # NOTE: x stays in its native dtype; the kernel casts in-vreg.

    grid = (n_pad // tile,)

    # Weights/biases use the same block every grid step -> single-buffer them.
    def const_spec(shape):
        return pl.BlockSpec(shape, lambda i: (0,) * len(shape),
                            pipeline_mode=pl.Buffered(1))

    out = pl.pallas_call(
        _mlp_kernel,
        # bf16 output halves the (largest) HBM writeback stream while keeping
        # the store lane-dense; upcast to f32 after the slice below.
        out_shape=jax.ShapeDtypeStruct((n_pad, n_out_pad), jnp.bfloat16),
        grid_spec=pltpu.PrefetchScalarGridSpec(
            num_scalar_prefetch=0,
            grid=grid,
            in_specs=[
                pl.BlockSpec((tile, input_size), lambda i: (i, 0)),  # x tile
                const_spec((input_size, h1)),                        # W1^T
                const_spec((1, h1)),                                 # b1
                const_spec((h1, h2)),                                # W2^T
                const_spec((1, h2)),                                 # b2
                const_spec((h2, n_out_pad)),                         # W3^T (padded)
                const_spec((1, n_out_pad)),                          # b3 (padded)
            ],
            out_specs=pl.BlockSpec((tile, n_out_pad), lambda i: (i, 0)),
        ),
        compiler_params=pltpu.CompilerParams(
            dimension_semantics=("parallel",),       # batch steps shard across TCs
            vmem_limit_bytes=32 * 1024 * 1024,
            # TODO(synk): if hidden sizes grow past ~2k, switch to a K/N-tiled
            # grid with an f32 accumulator instead of keeping all weights
            # resident (v7x has only 64 MiB physical VMEM).
        ),
    )(x_p, w1, b1, w2, b2, w3, b3)

    # Drop batch padding + lane padding of the 10-wide logits; return f32.
    return out[:n, :num_classes].astype(jnp.float32)


def init_mlp_params(key, input_size, hidden_sizes, num_classes=10):
    """Deterministic init mirroring nn.Linear shapes. Weights are stored
    transposed (in, out) relative to PyTorch's (out, in)."""
    dims = [input_size] + list(hidden_sizes) + [num_classes]
    params = []
    for d_in, d_out in zip(dims[:-1], dims[1:]):
        key, kw, kb = jax.random.split(key, 3)
        bound = 1.0 / (d_in ** 0.5)                  # PyTorch default Linear init
        w = jax.random.uniform(kw, (d_in, d_out), jnp.float32, -bound, bound)
        b = jax.random.uniform(kb, (d_out,), jnp.float32, -bound, bound)
        params.extend([w, b])
    return tuple(params)


def mlp_reference(x, params, input_size):
    """Pure-JAX f32 reference (matches the PyTorch forward)."""
    w1, b1, w2, b2, w3, b3 = params
    out = x.reshape(-1, input_size)
    out = jnp.maximum(out @ w1 + b1, 0.0)
    out = jnp.maximum(out @ w2 + b2, 0.0)
    return out @ w3 + b3


if __name__ == "__main__":
    # Small shapes consistent with the module's forward:
    #   input flattens to (-1, input_size); two hidden layers; 10 output classes.
    INPUT_SIZE = 128
    HIDDEN_SIZES = [256, 128]
    NUM_CLASSES = 10

    key = jax.random.PRNGKey(0)
    key, kx1, kx2, kp = jax.random.split(key, 4)

    params = init_mlp_params(kp, INPUT_SIZE, HIDDEN_SIZES, NUM_CLASSES)
    prepared = prepare_mlp_params(params)            # one-time bf16 cast / pad

    # Case 1: batch of 30 "images" given as (30, 2, 64) -> flattens to (30, 128).
    # Not a multiple of the tile -> exercises the padding + single-block path.
    x_small = jax.random.normal(kx1, (30, 2, 64), jnp.float32)
    logits_small = mlp_forward(x_small, prepared, input_size=INPUT_SIZE)
    jax.block_until_ready(logits_small)

    ref_small = mlp_reference(x_small, params, INPUT_SIZE)
    assert logits_small.shape == (30, NUM_CLASSES), logits_small.shape
    err_small = float(jnp.max(jnp.abs(logits_small - ref_small)))
    assert jnp.allclose(logits_small, ref_small, atol=1e-1, rtol=1e-1), (
        f"small-batch mismatch vs reference, max err = {err_small}")

    # Case 2: batch of 600 -> tile=512, grid=(2,) -> exercises the multi-step
    # (dual-TensorCore on v7x) path and the batch-padding path together.
    x_large = jax.random.normal(kx2, (600, INPUT_SIZE), jnp.float32)
    logits_large = mlp_forward(x_large, prepared, input_size=INPUT_SIZE)
    jax.block_until_ready(logits_large)

    ref_large = mlp_reference(x_large, params, INPUT_SIZE)
    assert logits_large.shape == (600, NUM_CLASSES), logits_large.shape
    err_large = float(jnp.max(jnp.abs(logits_large - ref_large)))
    assert jnp.allclose(logits_large, ref_large, atol=1e-1, rtol=1e-1), (
        f"large-batch mismatch vs reference, max err = {err_large}")

    print("KERNEL_OK")
</pallas_src>

<mosaic_0001>
module attributes {stable_mosaic.version = 11 : i64} {
  func.func @_mlp_kernel(%arg0: i32, %arg1: memref<32x128xf32, #tpu.memory_space<vmem>>, %arg2: memref<128x256xbf16, #tpu.memory_space<vmem>>, %arg3: memref<1x256xf32, #tpu.memory_space<vmem>>, %arg4: memref<256x128xbf16, #tpu.memory_space<vmem>>, %arg5: memref<1x128xf32, #tpu.memory_space<vmem>>, %arg6: memref<128x128xbf16, #tpu.memory_space<vmem>>, %arg7: memref<1x128xf32, #tpu.memory_space<vmem>>, %arg8: memref<32x128xbf16, #tpu.memory_space<vmem>>) attributes {dimension_semantics = [#tpu.dimension_semantics<parallel>], iteration_bounds = array<i64: 1>, scalar_prefetch = 0 : i64, scratch_operands = 0 : i64, tpu.core_type = #tpu.core_type<tc>, window_params = [{transform_indices = @transform_0, window_bounds = array<i64: 32, 128>}, {pipeline_mode = #tpu.pipeline_mode<synchronous>, transform_indices = @transform_1, window_bounds = array<i64: 128, 256>}, {pipeline_mode = #tpu.pipeline_mode<synchronous>, transform_indices = @transform_2, window_bounds = array<i64: 1, 256>}, {pipeline_mode = #tpu.pipeline_mode<synchronous>, transform_indices = @transform_3, window_bounds = array<i64: 256, 128>}, {pipeline_mode = #tpu.pipeline_mode<synchronous>, transform_indices = @transform_4, window_bounds = array<i64: 1, 128>}, {pipeline_mode = #tpu.pipeline_mode<synchronous>, transform_indices = @transform_5, window_bounds = array<i64: 128, 128>}, {pipeline_mode = #tpu.pipeline_mode<synchronous>, transform_indices = @transform_6, window_bounds = array<i64: 1, 128>}, {transform_indices = @transform_7, window_bounds = array<i64: 32, 128>}]} {
    %c0 = arith.constant 0 : index
    %c0_0 = arith.constant 0 : index
    %0 = vector.load %arg1[%c0, %c0_0] : memref<32x128xf32, #tpu.memory_space<vmem>>, vector<32x128xf32>
    %1 = arith.truncf %0 : vector<32x128xf32> to vector<32x128xbf16>
    %c0_1 = arith.constant 0 : index
    %c0_2 = arith.constant 0 : index
    %2 = vector.load %arg2[%c0_1, %c0_2] : memref<128x256xbf16, #tpu.memory_space<vmem>>, vector<128x256xbf16>
    %cst = arith.constant dense<0.000000e+00> : vector<32x256xf32>
    %3 = tpu.matmul %1, %2, %cst {dimension_numbers = #tpu.dot_dimension_numbers<[1], [0], [0], [1], [0, 0, 1, 1], [], []>} : vector<32x128xbf16>, vector<128x256xbf16>, vector<32x256xf32> -> vector<32x256xf32>
    %c0_3 = arith.constant 0 : index
    %c0_4 = arith.constant 0 : index
    %4 = vector.load %arg3[%c0_3, %c0_4] : memref<1x256xf32, #tpu.memory_space<vmem>>, vector<1x256xf32>
    %5 = vector.broadcast %4 : vector<1x256xf32> to vector<32x256xf32>
    %6 = arith.addf %3, %5 : vector<32x256xf32>
    %cst_5 = arith.constant 0.000000e+00 : f32
    %7 = vector.broadcast %cst_5 : f32 to vector<32x256xf32>
    %8 = arith.maximumf %6, %7 : vector<32x256xf32>
    %9 = arith.truncf %8 : vector<32x256xf32> to vector<32x256xbf16>
    %c0_6 = arith.constant 0 : index
    %c0_7 = arith.constant 0 : index
    %10 = vector.load %arg4[%c0_6, %c0_7] : memref<256x128xbf16, #tpu.memory_space<vmem>>, vector<256x128xbf16>
    %cst_8 = arith.constant dense<0.000000e+00> : vector<32x128xf32>
    %11 = tpu.matmul %9, %10, %cst_8 {dimension_numbers = #tpu.dot_dimension_numbers<[1], [0], [0], [1], [0, 0, 1, 1], [], []>} : vector<32x256xbf16>, vector<256x128xbf16>, vector<32x128xf32> -> vector<32x128xf32>
    %c0_9 = arith.constant 0 : index
    %c0_10 = arith.constant 0 : index
    %12 = vector.load %arg5[%c0_9, %c0_10] : memref<1x128xf32, #tpu.memory_space<vmem>>, vector<1x128xf32>
    %13 = vector.broadcast %12 : vector<1x128xf32> to vector<32x128xf32>
    %14 = arith.addf %11, %13 : vector<32x128xf32>
    %cst_11 = arith.constant 0.000000e+00 : f32
    %15 = vector.broadcast %cst_11 : f32 to vector<32x128xf32>
    %16 = arith.maximumf %14, %15 : vector<32x128xf32>
    %17 = arith.truncf %16 : vector<32x128xf32> to vector<32x128xbf16>
    %c0_12 = arith.constant 0 : index
    %c0_13 = arith.constant 0 : index
    %18 = vector.load %arg6[%c0_12, %c0_13] : memref<128x128xbf16, #tpu.memory_space<vmem>>, vector<128x128xbf16>
    %cst_14 = arith.constant dense<0.000000e+00> : vector<32x128xf32>
    %19 = tpu.matmul %17, %18, %cst_14 {dimension_numbers = #tpu.dot_dimension_numbers<[1], [0], [0], [1], [0, 0, 1, 1], [], []>} : vector<32x128xbf16>, vector<128x128xbf16>, vector<32x128xf32> -> vector<32x128xf32>
    %c0_15 = arith.constant 0 : index
    %c0_16 = arith.constant 0 : index
    %20 = vector.load %arg7[%c0_15, %c0_16] : memref<1x128xf32, #tpu.memory_space<vmem>>, vector<1x128xf32>
    %21 = vector.broadcast %20 : vector<1x128xf32> to vector<32x128xf32>
    %22 = arith.addf %19, %21 : vector<32x128xf32>
    %23 = arith.truncf %22 : vector<32x128xf32> to vector<32x128xbf16>
    %c0_17 = arith.constant 0 : index
    %c0_18 = arith.constant 0 : index
    %24 = vector.load %arg8[%c0_17, %c0_18] : memref<32x128xbf16, #tpu.memory_space<vmem>>, vector<32x128xbf16>
    tpu.vector_store %arg8[%c0_17, %c0_18], %23 {strides = array<i32>} : memref<32x128xbf16, #tpu.memory_space<vmem>>, vector<32x128xbf16>,
    return
  }
  func.func @transform_0(%arg0: i32) -> (i32, i32) {
    %c0_i32 = arith.constant 0 : i32
    %c0_i32_0 = arith.constant 0 : i32
    return %arg0, %c0_i32 : i32, i32
  }
  func.func @transform_1(%arg0: i32) -> (i32, i32) {
    %c0_i32 = arith.constant 0 : i32
    %c0_i32_0 = arith.constant 0 : i32
    %c0_i32_1 = arith.constant 0 : i32
    return %c0_i32, %c0_i32_0 : i32, i32
  }
  func.func @transform_2(%arg0: i32) -> (i32, i32) {
    %c0_i32 = arith.constant 0 : i32
    %c0_i32_0 = arith.constant 0 : i32
    %c0_i32_1 = arith.constant 0 : i32
    return %c0_i32, %c0_i32_0 : i32, i32
  }
  func.func @transform_3(%arg0: i32) -> (i32, i32) {
    %c0_i32 = arith.constant 0 : i32
    %c0_i32_0 = arith.constant 0 : i32
    %c0_i32_1 = arith.constant 0 : i32
    return %c0_i32, %c0_i32_0 : i32, i32
  }
  func.func @transform_4(%arg0: i32) -> (i32, i32) {
    %c0_i32 = arith.constant 0 : i32
    %c0_i32_0 = arith.constant 0 : i32
    %c0_i32_1 = arith.constant 0 : i32
    return %c0_i32, %c0_i32_0 : i32, i32
  }
  func.func @transform_5(%arg0: i32) -> (i32, i32) {
    %c0_i32 = arith.constant 0 : i32
    %c0_i32_0 = arith.constant 0 : i32
    %c0_i32_1 = arith.constant 0 : i32
    return %c0_i32, %c0_i32_0 : i32, i32
  }
  func.func @transform_6(%arg0: i32) -> (i32, i32) {
    %c0_i32 = arith.constant 0 : i32
    %c0_i32_0 = arith.constant 0 : i32
    %c0_i32_1 = arith.constant 0 : i32
    return %c0_i32, %c0_i32_0 : i32, i32
  }
  func.func @transform_7(%arg0: i32) -> (i32, i32) {
    %c0_i32 = arith.constant 0 : i32
    %c0_i32_0 = arith.constant 0 : i32
    return %arg0, %c0_i32 : i32, i32
  }
}

</mosaic_0001>

<llo_original>
// kernel: mlp_forward.1
$region0: #{mlp_forward.1}
  #allocation0 [shape = 'u32[]', space=smem, size = 0x4, offset = 0x4, fixed_abs, tag = 'smem constant byte address 0x4 - core index']
  #allocation1 [shape = 'u32[144,128]{1,0:T(1,128)}', space=vmem, size = 0x12000, scoped, tag = 'internal scratch']
  %s0 = inlined_call_operand.vmem [shape: f32[32,128], index: 0, kind: input, shape index: {}]
  %s1 = inlined_call_operand.vmem [shape: bf16[128,256], index: 1, kind: input, shape index: {}]
  %s2 = inlined_call_operand.vmem [shape: f32[1,256], index: 2, kind: input, shape index: {}]
  %s3 = inlined_call_operand.hbm [shape: bf16[256,128], index: 3, kind: input, shape index: {}]
  %s4 = inlined_call_operand.vmem [shape: f32[1,128], index: 4, kind: input, shape index: {}]
  %s5 = inlined_call_operand.hbm [shape: bf16[128,128], index: 5, kind: input, shape index: {}]
  %s6 = inlined_call_operand.vmem [shape: f32[1,128], index: 6, kind: input, shape index: {}]
  %s7 = inlined_call_operand.vmem [shape: bf16[32,128], index: 7, kind: output, shape index: {}]
  %s8 = sld [smem:[#allocation0]]
  $region46: #{mlp_forward.1} parent=0
    _
  %s10 = ssub.s32 1, %s8
  %s11 = scalar_select 0, %s10, %s8
  $region1: #{mlp_forward.1} parent=0
    #allocation2 [shape = 'u8[65536]{0}', space=vmem, size = 0x10000, scoped, tag = 'input window, operand 3, single buffered']
    #allocation3 [shape = 's32[1]{0}', space=sflag, size = 0x4, scoped, tag = 'scoped memory for mlp_forward.1']
    #allocation4 [shape = 'u8[32768]{0}', space=vmem, size = 0x8000, scoped, tag = 'input window, operand 5, single buffered']
    #allocation5 [shape = 's32[1]{0}', space=sflag, size = 0x4, scoped, tag = 'scoped memory for mlp_forward.1']
    %12 = vsyncpa [#allocation3], 0
    %13 = vsyncpa [#allocation5], 0
    // Predicated region
    $region2: #{mlp_forward.1} parent=1 // pred_check
      _
    $region3: #{mlp_forward.1} parent=1 // pred_check_branch
      %15 = sbr.rel (0) target = $region5
    $region4: #{mlp_forward.1} parent=1 // pred_region
      _
    $region5: #{mlp_forward.1} parent=1 // pred_fallthru
      _
    // Predicated region
    $region6: #{mlp_forward.1} parent=1 // pred_check
      _
    $region7: #{mlp_forward.1} parent=1 // pred_check_branch
      %17 = sbr.rel (0) target = $region9
    $region8: #{mlp_forward.1} parent=1 // pred_region
      _
    $region9: #{mlp_forward.1} parent=1 // pred_fallthru
      _
    // Predicated region
    $region10: #{mlp_forward.1} parent=1 // pred_check
      _
    $region11: #{mlp_forward.1} parent=1 // pred_check_branch
      %19 = sbr.rel (0) target = $region13
    $region12: #{mlp_forward.1} parent=1 // pred_region
      _
    $region13: #{mlp_forward.1} parent=1 // pred_fallthru
      _
    // Predicated region
    $region14: #{mlp_forward.1} parent=1 // pred_check
      _
    $region15: #{mlp_forward.1} parent=1 // pred_check_branch
      %21 = sbr.rel (0) target = $region17
    $region16: #{mlp_forward.1} parent=1 // pred_region
      %s23 = ssub.s32 2048, 2048
      %24 = vsyncadd [#allocation3], %s23
      %s25 = sshll.u32 [#allocation2], 4
      %s26 = int_to_ptr.vmem [resolvable:$true] %s25
      %31 = dma.hbm_to_vmem [thread:$0]  %s3, 2048, %s26, [#allocation3], 64, 64, 4
    $region17: #{mlp_forward.1} parent=1 // pred_fallthru
      _
    // Predicated region
    $region18: #{mlp_forward.1} parent=1 // pred_check
      _
    $region19: #{mlp_forward.1} parent=1 // pred_check_branch
      %33 = sbr.rel (0) target = $region21
    $region20: #{mlp_forward.1} parent=1 // pred_region
      _
    $region21: #{mlp_forward.1} parent=1 // pred_fallthru
      _
    // Predicated region
    $region22: #{mlp_forward.1} parent=1 // pred_check
      _
    $region23: #{mlp_forward.1} parent=1 // pred_check_branch
      %35 = sbr.rel (0) target = $region25
    $region24: #{mlp_forward.1} parent=1 // pred_region
      %s37 = ssub.s32 1024, 1024
      %38 = vsyncadd [#allocation5], %s37
      %s39 = sshll.u32 [#allocation4], 4
      %s40 = int_to_ptr.vmem [resolvable:$true] %s39
      %45 = dma.hbm_to_vmem [thread:$0]  %s5, 1024, %s40, [#allocation5], 64, 64, 4
    $region25: #{mlp_forward.1} parent=1 // pred_fallthru
      _
    // Predicated region
    $region26: #{mlp_forward.1} parent=1 // pred_check
      _
    $region27: #{mlp_forward.1} parent=1 // pred_check_branch
      %47 = sbr.rel (0) target = $region29
    $region28: #{mlp_forward.1} parent=1 // pred_region
      _
    $region29: #{mlp_forward.1} parent=1 // pred_fallthru
      _
    // Predicated region
    $region30: #{mlp_forward.1} parent=1 // pred_check
      _
    $region31: #{mlp_forward.1} parent=1 // pred_check_branch
      %49 = sbr.rel (0) target = $region33
    $region32: #{mlp_forward.1} parent=1 // pred_region
      %50 = dma.done [#allocation3], 2048
    $region33: #{mlp_forward.1} parent=1 // pred_fallthru
      _
    // Predicated region
    $region34: #{mlp_forward.1} parent=1 // pred_check
      _
    $region35: #{mlp_forward.1} parent=1 // pred_check_branch
      %52 = sbr.rel (0) target = $region37
    $region36: #{mlp_forward.1} parent=1 // pred_region
      %53 = dma.done [#allocation5], 1024
    $region37: #{mlp_forward.1} parent=1 // pred_fallthru
      _
    %v55 = vld [vmem:[%s0] sm:$0xff]
    %v56 = vld [vmem:[%s0 + $0x8] sm:$0xff]
    %v57 = vld [vmem:[%s0 + $0x10] sm:$0xff]
    %v58 = vld [vmem:[%s0 + $0x18] sm:$0xff]
    %v59 = vpack.c.bf16 %v56, %v55
    %v60 = vpack.c.bf16 %v58, %v57
    %v61 = vld [vmem:[%s1] sm:$0xff]
    %v62 = vld [vmem:[%s1 + $0x8] sm:$0xff]
    %v63 = vld [vmem:[%s1 + $0x10] sm:$0xff]
    %v64 = vld [vmem:[%s1 + $0x18] sm:$0xff]
    %v65 = vld [vmem:[%s1 + $0x20] sm:$0xff]
    %v66 = vld [vmem:[%s1 + $0x28] sm:$0xff]
    %v67 = vld [vmem:[%s1 + $0x30] sm:$0xff]
    %v68 = vld [vmem:[%s1 + $0x38] sm:$0xff]
    %v69 = vld [vmem:[%s1 + $0x40] sm:$0xff]
    %v70 = vld [vmem:[%s1 + $0x48] sm:$0xff]
    %v71 = vld [vmem:[%s1 + $0x50] sm:$0xff]
    %v72 = vld [vmem:[%s1 + $0x58] sm:$0xff]
    %v73 = vld [vmem:[%s1 + $0x60] sm:$0xff]
    %v74 = vld [vmem:[%s1 + $0x68] sm:$0xff]
    %v75 = vld [vmem:[%s1 + $0x70] sm:$0xff]
    %v76 = vld [vmem:[%s1 + $0x78] sm:$0xff]
    %v77 = vld [vmem:[%s2] sm:$0x3]
    %v79 = vlaneseq
    %v80 = vshrl.u32 %v79, 7
    %v81 = vsub.s32 0, %v80
    %v82 = vrot.slane %v77, %v81
    %v83 = vlaneseq
    %v84 = vshrl.u32 %v83, 7
    %v85 = vsub.s32 1, %v84
    %v86 = vrot.slane %v77, %v85
    %v105 = vunpack.c.l.b16 %v61
    %v106 = vunpack.c.h.b16 %v61
    %v107 = vunpack.c.l.b16 %v62
    %v108 = vunpack.c.h.b16 %v62
    %v109 = vunpack.c.l.b16 %v63
    %v110 = vunpack.c.h.b16 %v63
    %v111 = vunpack.c.l.b16 %v64
    %v112 = vunpack.c.h.b16 %v64
    %v113 = vunpack.c.l.b16 %v65
    %v114 = vunpack.c.h.b16 %v65
    %v115 = vunpack.c.l.b16 %v66
    %v116 = vunpack.c.h.b16 %v66
    %v117 = vunpack.c.l.b16 %v67
    %v118 = vunpack.c.h.b16 %v67
    %v119 = vunpack.c.l.b16 %v68
    %v120 = vunpack.c.h.b16 %v68
    %v121 = vunpack.c.l.b16 %v69
    %v122 = vunpack.c.h.b16 %v69
    %v123 = vunpack.c.l.b16 %v70
    %v124 = vunpack.c.h.b16 %v70
    %v125 = vunpack.c.l.b16 %v71
    %v126 = vunpack.c.h.b16 %v71
    %v127 = vunpack.c.l.b16 %v72
    %v128 = vunpack.c.h.b16 %v72
    %v129 = vunpack.c.l.b16 %v73
    %v130 = vunpack.c.h.b16 %v73
    %v131 = vunpack.c.l.b16 %v74
    %v132 = vunpack.c.h.b16 %v74
    %v133 = vunpack.c.l.b16 %v75
    %v134 = vunpack.c.h.b16 %v75
    %v135 = vunpack.c.l.b16 %v76
    %v136 = vunpack.c.h.b16 %v76
    %v137 = vpack.c.b16 %v107, %v105
    %v138 = vpack.c.b16 %v108, %v106
    %v139 = vpack.c.b16 %v111, %v109
    %v140 = vpack.c.b16 %v112, %v110
    %v141 = vpack.c.b16 %v115, %v113
    %v142 = vpack.c.b16 %v116, %v114
    %v143 = vpack.c.b16 %v119, %v117
    %v144 = vpack.c.b16 %v120, %v118
    %v145 = vpack.c.b16 %v123, %v121
    %v146 = vpack.c.b16 %v124, %v122
    %v147 = vpack.c.b16 %v127, %v125
    %v148 = vpack.c.b16 %v128, %v126
    %v149 = vpack.c.b16 %v131, %v129
    %v150 = vpack.c.b16 %v132, %v130
    %v151 = vpack.c.b16 %v135, %v133
    %v152 = vpack.c.b16 %v136, %v134
    %169 = vmatprep.subr.bf16.mxu0 %v138
    %170 = vmatpush1.bf16.msra.mxu0 %v137
    %171 = vmatprep.subr.bf16.mxu0 %v140
    %172 = vmatpush1.bf16.msra.mxu0 %v139
    %173 = vmatprep.subr.bf16.mxu0 %v142
    %174 = vmatpush1.bf16.msra.mxu0 %v141
    %175 = vmatprep.subr.bf16.mxu0 %v144
    %176 = vmatpush1.bf16.msra.mxu0 %v143
    %177 = vmatprep.subr.bf16.mxu0 %v146
    %178 = vmatpush1.bf16.msra.mxu0 %v145
    %179 = vmatprep.subr.bf16.mxu0 %v148
    %180 = vmatpush1.bf16.msra.mxu0 %v147
    %181 = vmatprep.subr.bf16.mxu0 %v150
    %182 = vmatpush1.bf16.msra.mxu0 %v149
    %183 = vmatprep.subr.bf16.mxu0 %v152
    %184 = vmatpush1.bf16.msra.mxu0 %v151
    %185 = vmatprep.subr.bf16.mxu0 0
    %186 = vmatpush1.bf16.msra.mxu0 0
    %187 = vmatprep.subr.bf16.mxu0 0
    %188 = vmatpush1.bf16.msra.mxu0 0
    %189 = vmatprep.subr.bf16.mxu0 0
    %190 = vmatpush1.bf16.msra.mxu0 0
    %191 = vmatprep.subr.bf16.mxu0 0
    %192 = vmatpush1.bf16.msra.mxu0 0
    %193 = vmatprep.subr.bf16.mxu0 0
    %194 = vmatpush1.bf16.msra.mxu0 0
    %195 = vmatprep.subr.bf16.mxu0 0
    %196 = vmatpush1.bf16.msra.mxu0 0
    %197 = vmatprep.subr.bf16.mxu0 0
    %198 = vmatpush1.bf16.msra.mxu0 0
    %199 = vmatprep.subr.bf16.mxu0 0
    %200 = vmatpush1.bf16.msra.mxu0 0
    %201 = vmatprep.mubr.bf16.mxu0 0
    %202 = vmatmul.mubr.bf16.gmra.mrb[0].mxu0 %v59
    %v203 = vpop.f32.mrb[0].mxu0
    %v204 = vadd.f32 %v82, %v203
    %v205 = vpop.f32.mrb[0].mxu0
    %v206 = vadd.f32 %v86, %v205
    %v207 = vpop.f32.mrb[0].mxu0
    %v208 = vadd.f32 %v82, %v207
    %v209 = vpop.f32.mrb[0].mxu0
    %v210 = vadd.f32 %v86, %v209
    %211 = vmatprep.mubr.bf16.mxu0 0
    %212 = vmatmul.mubr.bf16.gmra.mrb[0].mxu0 %v60
    %v213 = vpop.f32.mrb[0].mxu0
    %v214 = vadd.f32 %v82, %v213
    %v215 = vpop.f32.mrb[0].mxu0
    %v216 = vadd.f32 %v86, %v215
    %v217 = vpop.f32.mrb[0].mxu0
    %v218 = vadd.f32 %v82, %v217
    %v219 = vpop.f32.mrb[0].mxu0
    %v220 = vadd.f32 %v86, %v219
    %221 = vdwg.mxu0
    %v222 = vmax.f32 %v204, 0.0
    %v223 = vmax.f32 %v206, 0.0
    %v224 = vmax.f32 %v208, 0.0
    %v225 = vmax.f32 %v210, 0.0
    %v226 = vmax.f32 %v214, 0.0
    %v227 = vmax.f32 %v216, 0.0
    %v228 = vmax.f32 %v218, 0.0
    %v229 = vmax.f32 %v220, 0.0
    %v230 = vpack.c.bf16 %v224, %v222
    %v231 = vpack.c.bf16 %v225, %v223
    %v232 = vpack.c.bf16 %v228, %v226
    %v233 = vpack.c.bf16 %v229, %v227
    %v234 = vld [vmem:[#allocation2] sm:$0xf]
    %v235 = vld [vmem:[#allocation2 + $0x4] sm:$0xf]
    %v236 = vld [vmem:[#allocation2 + $0x8] sm:$0xf]
    %v237 = vld [vmem:[#allocation2 + $0xc] sm:$0xf]
    %v238 = vld [vmem:[#allocation2 + $0x10] sm:$0xf]
    %v239 = vld [vmem:[#allocation2 + $0x14] sm:$0xf]
    %v240 = vld [vmem:[#allocation2 + $0x18] sm:$0xf]
    %v241 = vld [vmem:[#allocation2 + $0x1c] sm:$0xf]
    %v242 = vld [vmem:[#allocation2 + $0x20] sm:$0xf]
    %v243 = vld [vmem:[#allocation2 + $0x24] sm:$0xf]
    %v244 = vld [vmem:[#allocation2 + $0x28] sm:$0xf]
    %v245 = vld [vmem:[#allocation2 + $0x2c] sm:$0xf]
    %v246 = vld [vmem:[#allocation2 + $0x30] sm:$0xf]
    %v247 = vld [vmem:[#allocation2 + $0x34] sm:$0xf]
    %v248 = vld [vmem:[#allocation2 + $0x38] sm:$0xf]
    %v249 = vld [vmem:[#allocation2 + $0x3c] sm:$0xf]
    %v250 = vld [vmem:[#allocation2 + $0x40] sm:$0xf]
    %v251 = vld [vmem:[#allocation2 + $0x44] sm:$0xf]
    %v252 = vld [vmem:[#allocation2 + $0x48] sm:$0xf]
    %v253 = vld [vmem:[#allocation2 + $0x4c] sm:$0xf]
    %v254 = vld [vmem:[#allocation2 + $0x50] sm:$0xf]
    %v255 = vld [vmem:[#allocation2 + $0x54] sm:$0xf]
    %v256 = vld [vmem:[#allocation2 + $0x58] sm:$0xf]
    %v257 = vld [vmem:[#allocation2 + $0x5c] sm:$0xf]
    %v258 = vld [vmem:[#allocation2 + $0x60] sm:$0xf]
    %v259 = vld [vmem:[#allocation2 + $0x64] sm:$0xf]
    %v260 = vld [vmem:[#allocation2 + $0x68] sm:$0xf]
    %v261 = vld [vmem:[#allocation2 + $0x6c] sm:$0xf]
    %v262 = vld [vmem:[#allocation2 + $0x70] sm:$0xf]
    %v263 = vld [vmem:[#allocation2 + $0x74] sm:$0xf]
    %v264 = vld [vmem:[#allocation2 + $0x78] sm:$0xf]
    %v265 = vld [vmem:[#allocation2 + $0x7c] sm:$0xf]
    %v266 = vld [vmem:[%s4] sm:$0x1]
    %v268 = vlaneseq
    %v269 = vshrl.u32 %v268, 7
    %v270 = vsub.s32 0, %v269
    %v271 = vrot.slane %v266, %v270
    %v305 = vunpack.c.l.b16 %v234
    %v306 = vunpack.c.l.b16 %v235
    %v307 = vunpack.c.l.b16 %v236
    %v308 = vunpack.c.l.b16 %v237
    %v309 = vunpack.c.l.b16 %v238
    %v310 = vunpack.c.l.b16 %v239
    %v311 = vunpack.c.l.b16 %v240
    %v312 = vunpack.c.l.b16 %v241
    %v313 = vunpack.c.l.b16 %v242
    %v314 = vunpack.c.l.b16 %v243
    %v315 = vunpack.c.l.b16 %v244
    %v316 = vunpack.c.l.b16 %v245
    %v317 = vunpack.c.l.b16 %v246
    %v318 = vunpack.c.l.b16 %v247
    %v319 = vunpack.c.l.b16 %v248
    %v320 = vunpack.c.l.b16 %v249
    %v321 = vunpack.c.l.b16 %v250
    %v322 = vunpack.c.l.b16 %v251
    %v323 = vunpack.c.l.b16 %v252
    %v324 = vunpack.c.l.b16 %v253
    %v325 = vunpack.c.l.b16 %v254
    %v326 = vunpack.c.l.b16 %v255
    %v327 = vunpack.c.l.b16 %v256
    %v328 = vunpack.c.l.b16 %v257
    %v329 = vunpack.c.l.b16 %v258
    %v330 = vunpack.c.l.b16 %v259
    %v331 = vunpack.c.l.b16 %v260
    %v332 = vunpack.c.l.b16 %v261
    %v333 = vunpack.c.l.b16 %v262
    %v334 = vunpack.c.l.b16 %v263
    %v335 = vunpack.c.l.b16 %v264
    %v336 = vunpack.c.l.b16 %v265
    %v337 = vpack.c.b16 %v306, %v305
    %v338 = vpack.c.b16 %v308, %v307
    %v339 = vpack.c.b16 %v310, %v309
    %v340 = vpack.c.b16 %v312, %v311
    %v341 = vpack.c.b16 %v314, %v313
    %v342 = vpack.c.b16 %v316, %v315
    %v343 = vpack.c.b16 %v318, %v317
    %v344 = vpack.c.b16 %v320, %v319
    %v345 = vpack.c.b16 %v322, %v321
    %v346 = vpack.c.b16 %v324, %v323
    %v347 = vpack.c.b16 %v326, %v325
    %v348 = vpack.c.b16 %v328, %v327
    %v349 = vpack.c.b16 %v330, %v329
    %v350 = vpack.c.b16 %v332, %v331
    %v351 = vpack.c.b16 %v334, %v333
    %v352 = vpack.c.b16 %v336, %v335
    %369 = vmatprep.subr.bf16.mxu0 0
    %370 = vmatpush1.bf16.msra.mxu0 %v337
    %371 = vmatprep.subr.bf16.mxu0 0
    %372 = vmatpush1.bf16.msra.mxu0 %v338
    %373 = vmatprep.subr.bf16.mxu0 0
    %374 = vmatpush1.bf16.msra.mxu0 %v339
    %375 = vmatprep.subr.bf16.mxu0 0
    %376 = vmatpush1.bf16.msra.mxu0 %v340
    %377 = vmatprep.subr.bf16.mxu0 0
    %378 = vmatpush1.bf16.msra.mxu0 %v341
    %379 = vmatprep.subr.bf16.mxu0 0
    %380 = vmatpush1.bf16.msra.mxu0 %v342
    %381 = vmatprep.subr.bf16.mxu0 0
    %382 = vmatpush1.bf16.msra.mxu0 %v343
    %383 = vmatprep.subr.bf16.mxu0 0
    %384 = vmatpush1.bf16.msra.mxu0 %v344
    %385 = vmatprep.subr.bf16.mxu0 0
    %386 = vmatpush1.bf16.msra.mxu0 %v345
    %387 = vmatprep.subr.bf16.mxu0 0
    %388 = vmatpush1.bf16.msra.mxu0 %v346
    %389 = vmatprep.subr.bf16.mxu0 0
    %390 = vmatpush1.bf16.msra.mxu0 %v347
    %391 = vmatprep.subr.bf16.mxu0 0
    %392 = vmatpush1.bf16.msra.mxu0 %v348
    %393 = vmatprep.subr.bf16.mxu0 0
    %394 = vmatpush1.bf16.msra.mxu0 %v349
    %395 = vmatprep.subr.bf16.mxu0 0
    %396 = vmatpush1.bf16.msra.mxu0 %v350
    %397 = vmatprep.subr.bf16.mxu0 0
    %398 = vmatpush1.bf16.msra.mxu0 %v351
    %399 = vmatprep.subr.bf16.mxu0 0
    %400 = vmatpush1.bf16.msra.mxu0 %v352
    %401 = vmatprep.mubr.bf16.mxu0 %v231
    %402 = vmatmul.mubr.bf16.gmra.mrb[0].mxu0 %v230
    %v403 = vpop.f32.mrb[0].mxu0
    %v404 = vadd.f32 %v271, %v403
    %v405 = vpop.f32.mrb[0].mxu0
    %v406 = vpop.f32.mrb[0].mxu0
    %v407 = vadd.f32 %v271, %v406
    %v408 = vpop.f32.mrb[0].mxu0
    %409 = vmatprep.mubr.bf16.mxu0 %v233
    %410 = vmatmul.mubr.bf16.gmra.mrb[0].mxu0 %v232
    %v411 = vpop.f32.mrb[0].mxu0
    %v412 = vadd.f32 %v271, %v411
    %v413 = vpop.f32.mrb[0].mxu0
    %v414 = vpop.f32.mrb[0].mxu0
    %v415 = vadd.f32 %v271, %v414
    %v416 = vpop.f32.mrb[0].mxu0
    %417 = vdwg.mxu0
    %v418 = vmax.f32 %v404, 0.0
    %v419 = vmax.f32 %v407, 0.0
    %v420 = vmax.f32 %v412, 0.0
    %v421 = vmax.f32 %v415, 0.0
    %v422 = vpack.c.bf16 %v419, %v418
    %v423 = vpack.c.bf16 %v421, %v420
    %v424 = vld [vmem:[#allocation4] sm:$0xf]
    %v425 = vld [vmem:[#allocation4 + $0x4] sm:$0xf]
    %v426 = vld [vmem:[#allocation4 + $0x8] sm:$0xf]
    %v427 = vld [vmem:[#allocation4 + $0xc] sm:$0xf]
    %v428 = vld [vmem:[#allocation4 + $0x10] sm:$0xf]
    %v429 = vld [vmem:[#allocation4 + $0x14] sm:$0xf]
    %v430 = vld [vmem:[#allocation4 + $0x18] sm:$0xf]
    %v431 = vld [vmem:[#allocation4 + $0x1c] sm:$0xf]
    %v432 = vld [vmem:[#allocation4 + $0x20] sm:$0xf]
    %v433 = vld [vmem:[#allocation4 + $0x24] sm:$0xf]
    %v434 = vld [vmem:[#allocation4 + $0x28] sm:$0xf]
    %v435 = vld [vmem:[#allocation4 + $0x2c] sm:$0xf]
    %v436 = vld [vmem:[#allocation4 + $0x30] sm:$0xf]
    %v437 = vld [vmem:[#allocation4 + $0x34] sm:$0xf]
    %v438 = vld [vmem:[#allocation4 + $0x38] sm:$0xf]
    %v439 = vld [vmem:[#allocation4 + $0x3c] sm:$0xf]
    %v440 = vld [vmem:[%s6] sm:$0x1]
    %v442 = vlaneseq
    %v443 = vshrl.u32 %v442, 7
    %v444 = vsub.s32 0, %v443
    %v445 = vrot.slane %v440, %v444
    %v463 = vunpack.c.l.b16 %v424
    %v464 = vunpack.c.l.b16 %v425
    %v465 = vunpack.c.l.b16 %v426
    %v466 = vunpack.c.l.b16 %v427
    %v467 = vunpack.c.l.b16 %v428
    %v468 = vunpack.c.l.b16 %v429
    %v469 = vunpack.c.l.b16 %v430
    %v470 = vunpack.c.l.b16 %v431
    %v471 = vunpack.c.l.b16 %v432
    %v472 = vunpack.c.l.b16 %v433
    %v473 = vunpack.c.l.b16 %v434
    %v474 = vunpack.c.l.b16 %v435
    %v475 = vunpack.c.l.b16 %v436
    %v476 = vunpack.c.l.b16 %v437
    %v477 = vunpack.c.l.b16 %v438
    %v478 = vunpack.c.l.b16 %v439
    %v479 = vpack.c.b16 %v464, %v463
    %v480 = vpack.c.b16 %v466, %v465
    %v481 = vpack.c.b16 %v468, %v467
    %v482 = vpack.c.b16 %v470, %v469
    %v483 = vpack.c.b16 %v472, %v471
    %v484 = vpack.c.b16 %v474, %v473
    %v485 = vpack.c.b16 %v476, %v475
    %v486 = vpack.c.b16 %v478, %v477
    %495 = vmatprep.subr.bf16.mxu0 0
    %496 = vmatpush1.bf16.msra.mxu0 %v479
    %497 = vmatprep.subr.bf16.mxu0 0
    %498 = vmatpush1.bf16.msra.mxu0 %v480
    %499 = vmatprep.subr.bf16.mxu0 0
    %500 = vmatpush1.bf16.msra.mxu0 %v481
    %501 = vmatprep.subr.bf16.mxu0 0
    %502 = vmatpush1.bf16.msra.mxu0 %v482
    %503 = vmatprep.subr.bf16.mxu0 0
    %504 = vmatpush1.bf16.msra.mxu0 %v483
    %505 = vmatprep.subr.bf16.mxu0 0
    %506 = vmatpush1.bf16.msra.mxu0 %v484
    %507 = vmatprep.subr.bf16.mxu0 0
    %508 = vmatpush1.bf16.msra.mxu0 %v485
    %509 = vmatprep.subr.bf16.mxu0 0
    %510 = vmatpush1.bf16.msra.mxu0 %v486
    %511 = vmatprep.subr.bf16.mxu0 0
    %512 = vmatpush1.bf16.msra.mxu0 0
    %513 = vmatprep.subr.bf16.mxu0 0
    %514 = vmatpush1.bf16.msra.mxu0 0
    %515 = vmatprep.subr.bf16.mxu0 0
    %516 = vmatpush1.bf16.msra.mxu0 0
    %517 = vmatprep.subr.bf16.mxu0 0
    %518 = vmatpush1.bf16.msra.mxu0 0
    %519 = vmatprep.subr.bf16.mxu0 0
    %520 = vmatpush1.bf16.msra.mxu0 0
    %521 = vmatprep.subr.bf16.mxu0 0
    %522 = vmatpush1.bf16.msra.mxu0 0
    %523 = vmatprep.subr.bf16.mxu0 0
    %524 = vmatpush1.bf16.msra.mxu0 0
    %525 = vmatprep.subr.bf16.mxu0 0
    %526 = vmatpush1.bf16.msra.mxu0 0
    %527 = vmatprep.mubr.bf16.mxu0 0
    %528 = vmatmul.mubr.bf16.gmra.mrb[0].mxu0 %v422
    %v529 = vpop.f32.mrb[0].mxu0
    %v530 = vadd.f32 %v445, %v529
    %v531 = vpop.f32.mrb[0].mxu0
    %v532 = vpop.f32.mrb[0].mxu0
    %v533 = vadd.f32 %v445, %v532
    %v534 = vpop.f32.mrb[0].mxu0
    %535 = vmatprep.mubr.bf16.mxu0 0
    %536 = vmatmul.mubr.bf16.gmra.mrb[0].mxu0 %v423
    %v537 = vpop.f32.mrb[0].mxu0
    %v538 = vadd.f32 %v445, %v537
    %v539 = vpop.f32.mrb[0].mxu0
    %v540 = vpop.f32.mrb[0].mxu0
    %v541 = vadd.f32 %v445, %v540
    %v542 = vpop.f32.mrb[0].mxu0
    %543 = vdwg.mxu0
    %v544 = vpack.c.bf16 %v533, %v530
    %v545 = vpack.c.bf16 %v541, %v538
    %v548 = vunpack.c.l.b16 %v544
    %v549 = vunpack.c.h.b16 %v544
    %v550 = vunpack.c.l.b16 %v545
    %v551 = vunpack.c.h.b16 %v545
    %v552 = vpack.c.b16 %v548, %v548
    %v553 = vpack.c.b16 %v549, %v549
    %v554 = vpack.c.b16 %v550, %v550
    %v555 = vpack.c.b16 %v551, %v551
    %560 = vst [vmem:[%s7] sm:$0xf] %v552
    %561 = vst [vmem:[%s7 + $0x4] sm:$0xf] %v553
    %562 = vst [vmem:[%s7 + $0x8] sm:$0xf] %v554
    %563 = vst [vmem:[%s7 + $0xc] sm:$0xf] %v555
    // Predicated region
    $region38: #{mlp_forward.1} parent=1 // pred_check
      _
    $region39: #{mlp_forward.1} parent=1 // pred_check_branch
      %565 = sbr.rel (0) target = $region41
    $region40: #{mlp_forward.1} parent=1 // pred_region
      _
    $region41: #{mlp_forward.1} parent=1 // pred_fallthru
      _
    // Predicated region
    $region42: #{mlp_forward.1} parent=1 // pred_check
      _
    $region43: #{mlp_forward.1} parent=1 // pred_check_branch
      %567 = sbr.rel (0) target = $region45
    $region44: #{mlp_forward.1} parent=1 // pred_region
      _
    $region45: #{mlp_forward.1} parent=1 // pred_fallthru
      _
    %568 = vsyncpa [#allocation3], 1
    %569 = vsyncpa [#allocation5], 1

</llo_original>
